<compile_context>
chip_gen: v5e
topology: v5e:2x2
jax: 0.10.0
libtpu: 0.0.40
codegen_flags: <defaults>
</compile_context>

<pallas_src>
import jax
import jax.numpy as jnp
from jax.experimental import pallas as pl
from jax.experimental.pallas import tpu as pltpu

LANE = 128          # TPU lane width: action dim is padded to a multiple of this.
_NEG_BIG = -1e30    # mask value for padded action logits (finite; exp() -> 0)


def _round_up(x, m):
    return ((x + m - 1) // m) * m


def actor_kernel(x_ref, w1_ref, b1_ref, w2_ref, b2_ref, out_ref):
    """One batch tile: (bm, S) -> (bm, num_action) softmax probabilities."""
    num_action = out_ref.shape[-1]

    # Cast to the matmul dtype in-kernel (no separate un-hidden wrapper pass).
    x = x_ref[...].astype(w1_ref.dtype)

    # fc1 + ReLU  (MXU matmul with f32 accumulation; bias add + ReLU in f32).
    h = jnp.dot(x, w1_ref[...], preferred_element_type=jnp.float32)
    h = jnp.maximum(h + b1_ref[...], 0.0)

    # Action head on the lane-padded weights; accumulation stays f32.
    logits = jnp.dot(h.astype(w2_ref.dtype), w2_ref[...],
                     preferred_element_type=jnp.float32) + b2_ref[...]

    # Softmax over the lane-padded action axis. Padded columns carry a -1e30
    # bias, so exp() of them is exactly 0 and the normalization equals the
    # softmax over the real actions. All row-wise: safe with a ragged last
    # batch tile (garbage tail rows never mix into real rows).
    m = jnp.max(logits, axis=-1, keepdims=True)
    e = jnp.exp(logits - m)
    denom = jnp.sum(e, axis=-1, keepdims=True)
    # Reciprocal on the EUP slot instead of a VPU divide; approx=False keeps
    # row sums within 1e-5.
    probs = e * pl.reciprocal(denom, approx=False)

    # Store only the real action columns: HBM writeback is num_action floats
    # per row (contiguous), not the 128-lane padded slab.
    out_ref[...] = probs[:, :num_action].astype(out_ref.dtype)


def prepare_actor_params(w1, b1, w2, b2, *, compute_dtype=jnp.float32):
    """One-time weight preparation (pad / mask / cast). Reuse every call.

    compute_dtype=jnp.bfloat16 halves weight + x DMA bytes and MXU passes on
    v5e, v6e and v7x (all have bf16-native MXUs); accumulation, bias, ReLU
    and the softmax always run in f32 inside the kernel.
    """
    S, H = w1.shape
    H2, A = w2.shape
    assert H2 == H
    A_pad = _round_up(A, LANE)

    # Lane-dense action head: pad to a multiple of 128; padded columns get a
    # huge negative bias so they get zero softmax weight.
    w2_p = jnp.zeros((H, A_pad), w2.dtype).at[:, :A].set(w2)
    b2_p = jnp.full((1, A_pad), _NEG_BIG, jnp.float32).at[0, :A].set(
        b2.astype(jnp.float32))
    b1_2d = b1.astype(jnp.float32).reshape(1, H)

    return dict(
        w1=w1.astype(compute_dtype),
        b1=b1_2d,
        w2=w2_p.astype(compute_dtype),
        b2=b2_p,
        num_action=A,
    )


def _pick_batch_tile(B, batch_block, sublane_mult):
    """Pick the batch tile: >=2 grid steps for mid/large batches (so both v7x
    TensorCores get work), tiles as large as batch_block to amortize the
    ~0.35 us/grid-step overhead, rows packed to the sublane multiple."""
    if B <= 2 * sublane_mult:
        return _round_up(B, sublane_mult)               # tiny batch: one tile
    if B <= batch_block:
        return _round_up(pl.cdiv(B, 2), sublane_mult)   # split into ~2 tiles
    return batch_block


def actor_forward(x, params, *, batch_block=1024):
    """x: (B, num_state) f32 -> action_prob: (B, num_action) f32.

    params:      output of prepare_actor_params (padding/casting done once).
    batch_block: max rows per grid step. 1024-2048 amortizes per-step
                 pipeline overhead for large rollout batches (keep a multiple
                 of 256 on v6e/v7x, 128 on v5e); mid-size batches are split
                 into two tiles automatically for the v7x dual TensorCore.
    """
    w1, b1, w2, b2 = params["w1"], params["b1"], params["w2"], params["b2"]
    A = params["num_action"]
    B, S = x.shape
    S_w, H = w1.shape
    H_w, A_pad = w2.shape
    assert S_w == S and H_w == H

    # bf16 vregs pack 16 sublanes -> keep the tile a multiple of 16 on the
    # bf16 MXU path (8 for f32).
    sublane_mult = 16 if w1.dtype == jnp.bfloat16 else 8
    bm = _pick_batch_tile(B, batch_block, sublane_mult)
    # Ragged grid: no wrapper-side batch padding; Mosaic clips the last
    # block's out-of-range stores (rows are independent -> safe).
    grid = (pl.cdiv(B, bm),)

    # Advisory cost so XLA can overlap the custom call with surrounding ops.
    flops = 2 * B * (S * H + H * A_pad) + 6 * B * A_pad
    bytes_accessed = (x.size * x.dtype.itemsize
                      + B * A * 4
                      + w1.size * w1.dtype.itemsize
                      + w2.size * w2.dtype.itemsize
                      + b1.size * 4 + b2.size * 4)
    cost = pl.CostEstimate(flops=flops,
                           transcendentals=B * (A_pad + 1),
                           bytes_accessed=bytes_accessed)

    return pl.pallas_call(
        actor_kernel,
        out_shape=jax.ShapeDtypeStruct((B, A), jnp.float32),
        grid=grid,
        in_specs=[
            pl.BlockSpec((bm, S), lambda i: (i, 0)),    # streamed batch tile
            # Weights/biases: constant index_map -> fetched once and resident
            # in VMEM across all batch tiles. (pipeline_mode=pl.Buffered(1)
            # would also drop their second pipeline buffer; left at the
            # default since ~0.6 MB of VMEM is noise on all generations.)
            pl.BlockSpec((S, H), lambda i: (0, 0)),
            pl.BlockSpec((1, H), lambda i: (0, 0)),
            pl.BlockSpec((H, A_pad), lambda i: (0, 0)),
            pl.BlockSpec((1, A_pad), lambda i: (0, 0)),
        ],
        # Unpadded output: only the real action columns hit HBM.
        out_specs=pl.BlockSpec((bm, A), lambda i: (i, 0)),
        compiler_params=pltpu.CompilerParams(
            # Batch tiles are independent -> shard across TensorCores (v7x).
            dimension_semantics=("parallel",),
        ),
        cost_estimate=cost,
    )(x, w1, b1, w2, b2)


def init_params(key, num_state, num_action, hidden=512):
    """Deterministic init mimicking nn.Linear default: U(-1/sqrt(fan_in), ...)."""
    k1, k2, k3, k4 = jax.random.split(key, 4)
    lim1 = 1.0 / jnp.sqrt(jnp.float32(num_state))
    lim2 = 1.0 / jnp.sqrt(jnp.float32(hidden))
    w1 = jax.random.uniform(k1, (num_state, hidden), jnp.float32, -lim1, lim1)
    b1 = jax.random.uniform(k2, (hidden,), jnp.float32, -lim1, lim1)
    w2 = jax.random.uniform(k3, (hidden, num_action), jnp.float32, -lim2, lim2)
    b2 = jax.random.uniform(k4, (num_action,), jnp.float32, -lim2, lim2)
    return w1, b1, w2, b2


def actor_ref(x, w1, b1, w2, b2):
    h = jnp.maximum(x @ w1 + b1, 0.0)
    return jax.nn.softmax(h @ w2 + b2, axis=1)


if __name__ == "__main__":
    key = jax.random.PRNGKey(0)
    kx, kp, kb = jax.random.split(key, 3)

    NUM_STATE = 32   # observation dim
    NUM_ACTION = 4   # discrete action count
    w1, b1, w2, b2 = init_params(kp, NUM_STATE, NUM_ACTION)

    # One-time weight prep (hoisted out of the per-call wrapper).
    params_f32 = prepare_actor_params(w1, b1, w2, b2)
    params_bf16 = prepare_actor_params(w1, b1, w2, b2,
                                       compute_dtype=jnp.bfloat16)

    # --- small single-tile call (B=8), f32 --------------------------------
    B = 8
    x = jax.random.normal(kx, (B, NUM_STATE), jnp.float32)
    probs = actor_forward(x, params_f32)
    jax.block_until_ready(probs)
    probs_ref = actor_ref(x, w1, b1, w2, b2)
    assert probs.shape == (B, NUM_ACTION)
    assert jnp.allclose(probs, probs_ref, atol=1e-5, rtol=1e-5)
    assert jnp.allclose(jnp.sum(probs, axis=1), 1.0, atol=1e-5)

    # --- ragged 2-step grid (B=300, no wrapper-side padding), f32 ---------
    B2 = 300
    x2 = jax.random.normal(kb, (B2, NUM_STATE), jnp.float32)
    probs2 = actor_forward(x2, params_f32)
    jax.block_until_ready(probs2)
    probs2_ref = actor_ref(x2, w1, b1, w2, b2)
    assert probs2.shape == (B2, NUM_ACTION)
    assert jnp.allclose(probs2, probs2_ref, atol=1e-5, rtol=1e-5)
    assert jnp.allclose(jnp.sum(probs2, axis=1), 1.0, atol=1e-5)

    # --- bf16 matmul inputs (bf16-native MXU on v5e/v6e/v7x); softmax f32 --
    probs_bf16 = actor_forward(x2, params_bf16)
    jax.block_until_ready(probs_bf16)
    assert probs_bf16.shape == (B2, NUM_ACTION)
    assert jnp.allclose(jnp.sum(probs_bf16, axis=1), 1.0, atol=1e-4)
    assert jnp.allclose(probs_bf16, probs2_ref, atol=2e-2, rtol=2e-2)

    # TODO(synk): for rollout-only use, fuse Categorical sampling into the
    # kernel (pltpu.prng_*) so probabilities never hit HBM at all.

    print("KERNEL_OK")
</pallas_src>

<mosaic_0001>
module attributes {stable_mosaic.version = 11 : i64} {
  func.func @actor_kernel(%arg0: i32, %arg1: memref<8x32xf32, #tpu.memory_space<vmem>>, %arg2: memref<32x512xf32, #tpu.memory_space<vmem>>, %arg3: memref<1x512xf32, #tpu.memory_space<vmem>>, %arg4: memref<512x128xf32, #tpu.memory_space<vmem>>, %arg5: memref<1x128xf32, #tpu.memory_space<vmem>>, %arg6: memref<8x4xf32, #tpu.memory_space<vmem>>) attributes {dimension_semantics = [#tpu.dimension_semantics<parallel>], iteration_bounds = array<i64: 1>, scalar_prefetch = 0 : i64, scratch_operands = 0 : i64, tpu.core_type = #tpu.core_type<tc>, window_params = [{transform_indices = @transform_0, window_bounds = array<i64: 8, 32>}, {pipeline_mode = #tpu.pipeline_mode<synchronous>, transform_indices = @transform_1, window_bounds = array<i64: 32, 512>}, {pipeline_mode = #tpu.pipeline_mode<synchronous>, transform_indices = @transform_2, window_bounds = array<i64: 1, 512>}, {pipeline_mode = #tpu.pipeline_mode<synchronous>, transform_indices = @transform_3, window_bounds = array<i64: 512, 128>}, {pipeline_mode = #tpu.pipeline_mode<synchronous>, transform_indices = @transform_4, window_bounds = array<i64: 1, 128>}, {transform_indices = @transform_5, window_bounds = array<i64: 8, 4>}]} {
    %c0 = arith.constant 0 : index
    %c0_0 = arith.constant 0 : index
    %0 = vector.load %arg1[%c0, %c0_0] : memref<8x32xf32, #tpu.memory_space<vmem>>, vector<8x32xf32>
    %c0_1 = arith.constant 0 : index
    %c0_2 = arith.constant 0 : index
    %1 = vector.load %arg2[%c0_1, %c0_2] : memref<32x512xf32, #tpu.memory_space<vmem>>, vector<32x512xf32>
    %cst = arith.constant dense<0.000000e+00> : vector<8x512xf32>
    %2 = tpu.matmul %0, %1, %cst {dimension_numbers = #tpu.dot_dimension_numbers<[1], [0], [0], [1], [0, 0, 1, 1], [], []>} : vector<8x32xf32>, vector<32x512xf32>, vector<8x512xf32> -> vector<8x512xf32>
    %c0_3 = arith.constant 0 : index
    %c0_4 = arith.constant 0 : index
    %3 = vector.load %arg3[%c0_3, %c0_4] : memref<1x512xf32, #tpu.memory_space<vmem>>, vector<1x512xf32>
    %4 = vector.broadcast %3 : vector<1x512xf32> to vector<8x512xf32>
    %5 = arith.addf %2, %4 : vector<8x512xf32>
    %cst_5 = arith.constant 0.000000e+00 : f32
    %6 = vector.broadcast %cst_5 : f32 to vector<8x512xf32>
    %7 = arith.maximumf %5, %6 : vector<8x512xf32>
    %c0_6 = arith.constant 0 : index
    %c0_7 = arith.constant 0 : index
    %8 = vector.load %arg4[%c0_6, %c0_7] : memref<512x128xf32, #tpu.memory_space<vmem>>, vector<512x128xf32>
    %cst_8 = arith.constant dense<0.000000e+00> : vector<8x128xf32>
    %9 = tpu.matmul %7, %8, %cst_8 {dimension_numbers = #tpu.dot_dimension_numbers<[1], [0], [0], [1], [0, 0, 1, 1], [], []>} : vector<8x512xf32>, vector<512x128xf32>, vector<8x128xf32> -> vector<8x128xf32>
    %c0_9 = arith.constant 0 : index
    %c0_10 = arith.constant 0 : index
    %10 = vector.load %arg5[%c0_9, %c0_10] : memref<1x128xf32, #tpu.memory_space<vmem>>, vector<1x128xf32>
    %11 = vector.broadcast %10 : vector<1x128xf32> to vector<8x128xf32>
    %12 = arith.addf %9, %11 : vector<8x128xf32>
    %cst_11 = arith.constant dense<0xFF800000> : vector<8xf32>
    %13 = vector.multi_reduction <maximumf>, %12, %cst_11 [1] : vector<8x128xf32> to vector<8xf32>
    %14 = vector.shape_cast %13 : vector<8xf32> to vector<8x1xf32>
    %15 = vector.broadcast %14 : vector<8x1xf32> to vector<8x128xf32>
    %16 = arith.subf %12, %15 : vector<8x128xf32>
    %17 = math.exp %16 : vector<8x128xf32>
    %cst_12 = arith.constant dense<0.000000e+00> : vector<8xf32>
    %18 = vector.multi_reduction <add>, %17, %cst_12 [1] : vector<8x128xf32> to vector<8xf32>
    %19 = vector.shape_cast %18 : vector<8xf32> to vector<8x1xf32>
    %20 = tpu.reciprocal %19 : vector<8x1xf32> -> vector<8x1xf32>
    %21 = vector.broadcast %20 : vector<8x1xf32> to vector<8x128xf32>
    %22 = arith.mulf %17, %21 : vector<8x128xf32>
    %23 = vector.extract_strided_slice %22 {offsets = [0, 0], sizes = [8, 4], strides = [1, 1]} : vector<8x128xf32> to vector<8x4xf32>
    %c0_13 = arith.constant 0 : index
    %c0_14 = arith.constant 0 : index
    %24 = vector.load %arg6[%c0_13, %c0_14] : memref<8x4xf32, #tpu.memory_space<vmem>>, vector<8x4xf32>
    tpu.vector_store %arg6[%c0_13, %c0_14], %23 {strides = array<i32>} : memref<8x4xf32, #tpu.memory_space<vmem>>, vector<8x4xf32>,
    return
  }
  func.func @transform_0(%arg0: i32) -> (i32, i32) {
    %c0_i32 = arith.constant 0 : i32
    %c0_i32_0 = arith.constant 0 : i32
    return %arg0, %c0_i32 : i32, i32
  }
  func.func @transform_1(%arg0: i32) -> (i32, i32) {
    %c0_i32 = arith.constant 0 : i32
    %c0_i32_0 = arith.constant 0 : i32
    %c0_i32_1 = arith.constant 0 : i32
    return %c0_i32, %c0_i32_0 : i32, i32
  }
  func.func @transform_2(%arg0: i32) -> (i32, i32) {
    %c0_i32 = arith.constant 0 : i32
    %c0_i32_0 = arith.constant 0 : i32
    %c0_i32_1 = arith.constant 0 : i32
    return %c0_i32, %c0_i32_0 : i32, i32
  }
  func.func @transform_3(%arg0: i32) -> (i32, i32) {
    %c0_i32 = arith.constant 0 : i32
    %c0_i32_0 = arith.constant 0 : i32
    %c0_i32_1 = arith.constant 0 : i32
    return %c0_i32, %c0_i32_0 : i32, i32
  }
  func.func @transform_4(%arg0: i32) -> (i32, i32) {
    %c0_i32 = arith.constant 0 : i32
    %c0_i32_0 = arith.constant 0 : i32
    %c0_i32_1 = arith.constant 0 : i32
    return %c0_i32, %c0_i32_0 : i32, i32
  }
  func.func @transform_5(%arg0: i32) -> (i32, i32) {
    %c0_i32 = arith.constant 0 : i32
    %c0_i32_0 = arith.constant 0 : i32
    return %arg0, %c0_i32 : i32, i32
  }
}

</mosaic_0001>

<llo_original>
// kernel: tpu_custom_call.1
$region0: #{tpu_custom_call.1}
  #allocation0 [shape = 'u32[]', space=smem, size = 0x4, offset = 0x4, fixed_abs, tag = 'smem constant byte address 0x4 - core index']
  #allocation1 [shape = 'u32[72,128]{1,0:T(1,128)}', space=vmem, size = 0x9000, scoped, tag = 'internal scratch']
  %s0 = inlined_call_operand.hbm [shape: f32[8,32], index: 0, kind: input, shape index: {}]
  %s1 = inlined_call_operand.hbm [shape: f32[32,512], index: 1, kind: input, shape index: {}]
  %s2 = inlined_call_operand.hbm [shape: f32[1,512], index: 2, kind: input, shape index: {}]
  %s3 = inlined_call_operand.hbm [shape: f32[512,128], index: 3, kind: input, shape index: {}]
  %s4 = inlined_call_operand.vmem [shape: f32[1,128], index: 4, kind: input, shape index: {}]
  %s5 = inlined_call_operand.vmem [shape: f32[8,4], index: 5, kind: output, shape index: {}]
  %s6 = sld [smem:[#allocation0]]
  $region46: #{tpu_custom_call.1} parent=0
    _
  %s8 = ssub.s32 1, %s6
  %s9 = scalar_select 0, %s8, %s6
  $region1: #{tpu_custom_call.1} parent=0
    #allocation2 [shape = 'u8[4096]{0}', space=vmem, size = 0x1000, scoped, tag = 'input window, operand 0, single buffered']
    #allocation3 [shape = 's32[1]{0}', space=sflag, size = 0x4, scoped, tag = 'scoped memory for tpu_custom_call.1']
    #allocation4 [shape = 'u8[65536]{0}', space=vmem, size = 0x10000, scoped, tag = 'input window, operand 1, single buffered']
    #allocation5 [shape = 's32[1]{0}', space=sflag, size = 0x4, scoped, tag = 'scoped memory for tpu_custom_call.1']
    #allocation6 [shape = 'u8[2048]{0}', space=vmem, size = 0x800, scoped, tag = 'input window, operand 2, single buffered']
    #allocation7 [shape = 'u8[262144]{0}', space=vmem, size = 0x40000, scoped, tag = 'input window, operand 3, single buffered']
    #allocation8 [shape = 's32[1]{0}', space=sflag, size = 0x4, scoped, tag = 'scoped memory for tpu_custom_call.1']
    %10 = vsyncpa [#allocation3], 0
    %11 = vsyncpa [#allocation5], 0
    %12 = vsyncpa [#allocation8], 0
    // Predicated region
    $region2: #{tpu_custom_call.1} parent=1 // pred_check
      _
    $region3: #{tpu_custom_call.1} parent=1 // pred_check_branch
      %14 = sbr.rel (0) target = $region5
    $region4: #{tpu_custom_call.1} parent=1 // pred_region
      %16 = vsyncadd [#allocation3], 0
      %s18 = sshll.u32 %s0, 4
      %s19 = int_to_ptr.hbm [resolvable:$true] %s18
      %s20 = sshll.u32 [#allocation2], 4
      %s21 = int_to_ptr.vmem [resolvable:$true] %s20
      %23 = dma.hbm_to_vmem [thread:$0]  %s19, 128, %s21, [#allocation3]
    $region5: #{tpu_custom_call.1} parent=1 // pred_fallthru
      _
    // Predicated region
    $region6: #{tpu_custom_call.1} parent=1 // pred_check
      _
    $region7: #{tpu_custom_call.1} parent=1 // pred_check_branch
      %25 = sbr.rel (0) target = $region9
    $region8: #{tpu_custom_call.1} parent=1 // pred_region
      %27 = vsyncadd [#allocation5], 0
      %s28 = sshll.u32 %s1, 4
      %s29 = int_to_ptr.hbm [resolvable:$true] %s28
      %s30 = sshll.u32 [#allocation4], 4
      %s31 = int_to_ptr.vmem [resolvable:$true] %s30
      %36 = dma.hbm_to_vmem [thread:$0]  %s29, 2048, %s31, [#allocation5], 512, 512, 32
    $region9: #{tpu_custom_call.1} parent=1 // pred_fallthru
      _
    // Predicated region
    $region10: #{tpu_custom_call.1} parent=1 // pred_check
      _
    $region11: #{tpu_custom_call.1} parent=1 // pred_check_branch
      %38 = sbr.rel (0) target = $region13
    $region12: #{tpu_custom_call.1} parent=1 // pred_region
      %40 = vsyncadd [#allocation5], 0
      %s42 = sshll.u32 %s2, 4
      %s43 = int_to_ptr.hbm [resolvable:$true] %s42
      %s44 = sshll.u32 [#allocation6], 4
      %s45 = int_to_ptr.vmem [resolvable:$true] %s44
      %47 = dma.hbm_to_vmem [thread:$0]  %s43, 64, %s45, [#allocation5]
    $region13: #{tpu_custom_call.1} parent=1 // pred_fallthru
      _
    // Predicated region
    $region14: #{tpu_custom_call.1} parent=1 // pred_check
      _
    $region15: #{tpu_custom_call.1} parent=1 // pred_check_branch
      %49 = sbr.rel (0) target = $region17
    $region16: #{tpu_custom_call.1} parent=1 // pred_region
      %51 = vsyncadd [#allocation8], 0
      %s52 = sshll.u32 %s3, 4
      %s53 = int_to_ptr.hbm [resolvable:$true] %s52
      %s54 = sshll.u32 [#allocation7], 4
      %s55 = int_to_ptr.vmem [resolvable:$true] %s54
      %60 = dma.hbm_to_vmem [thread:$0]  %s53, 8192, %s55, [#allocation8], 128, 128, 8
    $region17: #{tpu_custom_call.1} parent=1 // pred_fallthru
      _
    // Predicated region
    $region18: #{tpu_custom_call.1} parent=1 // pred_check
      _
    $region19: #{tpu_custom_call.1} parent=1 // pred_check_branch
      %62 = sbr.rel (0) target = $region21
    $region20: #{tpu_custom_call.1} parent=1 // pred_region
      _
    $region21: #{tpu_custom_call.1} parent=1 // pred_fallthru
      _
    // Predicated region
    $region22: #{tpu_custom_call.1} parent=1 // pred_check
      _
    $region23: #{tpu_custom_call.1} parent=1 // pred_check_branch
      %64 = sbr.rel (0) target = $region25
    $region24: #{tpu_custom_call.1} parent=1 // pred_region
      %66 = dma.done [#allocation3], 128
    $region25: #{tpu_custom_call.1} parent=1 // pred_fallthru
      _
    // Predicated region
    $region26: #{tpu_custom_call.1} parent=1 // pred_check
      _
    $region27: #{tpu_custom_call.1} parent=1 // pred_check_branch
      %68 = sbr.rel (0) target = $region29
    $region28: #{tpu_custom_call.1} parent=1 // pred_region
      %70 = dma.done [#allocation5], 2048
    $region29: #{tpu_custom_call.1} parent=1 // pred_fallthru
      _
    // Predicated region
    $region30: #{tpu_custom_call.1} parent=1 // pred_check
      _
    $region31: #{tpu_custom_call.1} parent=1 // pred_check_branch
      %72 = sbr.rel (0) target = $region33
    $region32: #{tpu_custom_call.1} parent=1 // pred_region
      %74 = dma.done [#allocation5], 64
    $region33: #{tpu_custom_call.1} parent=1 // pred_fallthru
      _
    // Predicated region
    $region34: #{tpu_custom_call.1} parent=1 // pred_check
      _
    $region35: #{tpu_custom_call.1} parent=1 // pred_check_branch
      %76 = sbr.rel (0) target = $region37
    $region36: #{tpu_custom_call.1} parent=1 // pred_region
      %78 = dma.done [#allocation8], 8192
    $region37: #{tpu_custom_call.1} parent=1 // pred_fallthru
      _
    %v79 = vld [vmem:[#allocation2] sm:$0xff]
    %v80 = vld [vmem:[#allocation4] sm:$0xff]
    %v81 = vld [vmem:[#allocation4 + $0x8] sm:$0xff]
    %v82 = vld [vmem:[#allocation4 + $0x10] sm:$0xff]
    %v83 = vld [vmem:[#allocation4 + $0x18] sm:$0xff]
    %v84 = vld [vmem:[#allocation4 + $0x20] sm:$0xff]
    %v85 = vld [vmem:[#allocation4 + $0x28] sm:$0xff]
    %v86 = vld [vmem:[#allocation4 + $0x30] sm:$0xff]
    %v87 = vld [vmem:[#allocation4 + $0x38] sm:$0xff]
    %v88 = vld [vmem:[#allocation4 + $0x40] sm:$0xff]
    %v89 = vld [vmem:[#allocation4 + $0x48] sm:$0xff]
    %v90 = vld [vmem:[#allocation4 + $0x50] sm:$0xff]
    %v91 = vld [vmem:[#allocation4 + $0x58] sm:$0xff]
    %v92 = vld [vmem:[#allocation4 + $0x60] sm:$0xff]
    %v93 = vld [vmem:[#allocation4 + $0x68] sm:$0xff]
    %v94 = vld [vmem:[#allocation4 + $0x70] sm:$0xff]
    %v95 = vld [vmem:[#allocation4 + $0x78] sm:$0xff]
    %v96 = vld [vmem:[#allocation6] sm:$0xf]
    %v98 = vperm.slane %v96, 0
    %v99 = vperm.slane %v96, 1
    %v100 = vperm.slane %v96, 2
    %v101 = vperm.slane %v96, 3
    %vm106 = vcmask 261120
    %v108 = vsel %vm106, %v79, 0
    %110 = vmatpush.msra.mxu0 0.0
    %111 = vmatpush.msra.mxu0 0.0
    %112 = vmatpush.msra.mxu0 0.0
    %113 = vmatpush.msra.mxu0 0.0
    %114 = vmatpush.msra.mxu0 0.0
    %115 = vmatpush.msra.mxu0 0.0
    %116 = vmatpush.msra.mxu0 0.0
    %117 = vmatpush.msra.mxu0 0.0
    %118 = vmatpush.msra.mxu0 0.0
    %119 = vmatpush.msra.mxu0 0.0
    %120 = vmatpush.msra.mxu0 0.0
    %121 = vmatpush.msra.mxu0 0.0
    %122 = vmatpush.msra.mxu0 %v92
    %123 = vmatpush.msra.mxu0 %v88
    %124 = vmatpush.msra.mxu0 %v84
    %125 = vmatpush.msra.mxu0 %v80
    %126 = vmatmul.f32.gmra.mxu0 %v108
    %v127 = vpop.f32.mrf.mxu0
    %v128 = vadd.f32 %v98, %v127
    %129 = vdwg.mxu0
    %130 = vmatpush.msra.mxu0 0.0
    %131 = vmatpush.msra.mxu0 0.0
    %132 = vmatpush.msra.mxu0 0.0
    %133 = vmatpush.msra.mxu0 0.0
    %134 = vmatpush.msra.mxu0 0.0
    %135 = vmatpush.msra.mxu0 0.0
    %136 = vmatpush.msra.mxu0 0.0
    %137 = vmatpush.msra.mxu0 0.0
    %138 = vmatpush.msra.mxu0 0.0
    %139 = vmatpush.msra.mxu0 0.0
    %140 = vmatpush.msra.mxu0 0.0
    %141 = vmatpush.msra.mxu0 0.0
    %142 = vmatpush.msra.mxu0 %v93
    %143 = vmatpush.msra.mxu0 %v89
    %144 = vmatpush.msra.mxu0 %v85
    %145 = vmatpush.msra.mxu0 %v81
    %146 = vmatmul.f32.gmra.mxu0 %v108
    %v147 = vpop.f32.mrf.mxu0
    %v148 = vadd.f32 %v99, %v147
    %149 = vdwg.mxu0
    %150 = vmatpush.msra.mxu0 0.0
    %151 = vmatpush.msra.mxu0 0.0
    %152 = vmatpush.msra.mxu0 0.0
    %153 = vmatpush.msra.mxu0 0.0
    %154 = vmatpush.msra.mxu0 0.0
    %155 = vmatpush.msra.mxu0 0.0
    %156 = vmatpush.msra.mxu0 0.0
    %157 = vmatpush.msra.mxu0 0.0
    %158 = vmatpush.msra.mxu0 0.0
    %159 = vmatpush.msra.mxu0 0.0
    %160 = vmatpush.msra.mxu0 0.0
    %161 = vmatpush.msra.mxu0 0.0
    %162 = vmatpush.msra.mxu0 %v94
    %163 = vmatpush.msra.mxu0 %v90
    %164 = vmatpush.msra.mxu0 %v86
    %165 = vmatpush.msra.mxu0 %v82
    %166 = vmatmul.f32.gmra.mxu0 %v108
    %v167 = vpop.f32.mrf.mxu0
    %v168 = vadd.f32 %v100, %v167
    %169 = vdwg.mxu0
    %170 = vmatpush.msra.mxu0 0.0
    %171 = vmatpush.msra.mxu0 0.0
    %172 = vmatpush.msra.mxu0 0.0
    %173 = vmatpush.msra.mxu0 0.0
    %174 = vmatpush.msra.mxu0 0.0
    %175 = vmatpush.msra.mxu0 0.0
    %176 = vmatpush.msra.mxu0 0.0
    %177 = vmatpush.msra.mxu0 0.0
    %178 = vmatpush.msra.mxu0 0.0
    %179 = vmatpush.msra.mxu0 0.0
    %180 = vmatpush.msra.mxu0 0.0
    %181 = vmatpush.msra.mxu0 0.0
    %182 = vmatpush.msra.mxu0 %v95
    %183 = vmatpush.msra.mxu0 %v91
    %184 = vmatpush.msra.mxu0 %v87
    %185 = vmatpush.msra.mxu0 %v83
    %186 = vmatmul.f32.gmra.mxu0 %v108
    %v187 = vpop.f32.mrf.mxu0
    %v188 = vadd.f32 %v101, %v187
    %189 = vdwg.mxu0
    %v190 = vmax.f32 %v128, 0.0
    %v191 = vmax.f32 %v148, 0.0
    %v192 = vmax.f32 %v168, 0.0
    %v193 = vmax.f32 %v188, 0.0
    %v194 = vld [vmem:[#allocation7] sm:$0xff]
    %v195 = vld [vmem:[#allocation7 + $0x8] sm:$0xff]
    %v196 = vld [vmem:[#allocation7 + $0x10] sm:$0xff]
    %v197 = vld [vmem:[#allocation7 + $0x18] sm:$0xff]
    %v198 = vld [vmem:[#allocation7 + $0x20] sm:$0xff]
    %v199 = vld [vmem:[#allocation7 + $0x28] sm:$0xff]
    %v200 = vld [vmem:[#allocation7 + $0x30] sm:$0xff]
    %v201 = vld [vmem:[#allocation7 + $0x38] sm:$0xff]
    %v202 = vld [vmem:[#allocation7 + $0x40] sm:$0xff]
    %v203 = vld [vmem:[#allocation7 + $0x48] sm:$0xff]
    %v204 = vld [vmem:[#allocation7 + $0x50] sm:$0xff]
    %v205 = vld [vmem:[#allocation7 + $0x58] sm:$0xff]
    %v206 = vld [vmem:[#allocation7 + $0x60] sm:$0xff]
    %v207 = vld [vmem:[#allocation7 + $0x68] sm:$0xff]
    %v208 = vld [vmem:[#allocation7 + $0x70] sm:$0xff]
    %v209 = vld [vmem:[#allocation7 + $0x78] sm:$0xff]
    %v210 = vld [vmem:[#allocation7 + $0x80] sm:$0xff]
    %v211 = vld [vmem:[#allocation7 + $0x88] sm:$0xff]
    %v212 = vld [vmem:[#allocation7 + $0x90] sm:$0xff]
    %v213 = vld [vmem:[#allocation7 + $0x98] sm:$0xff]
    %v214 = vld [vmem:[#allocation7 + $0xa0] sm:$0xff]
    %v215 = vld [vmem:[#allocation7 + $0xa8] sm:$0xff]
    %v216 = vld [vmem:[#allocation7 + $0xb0] sm:$0xff]
    %v217 = vld [vmem:[#allocation7 + $0xb8] sm:$0xff]
    %v218 = vld [vmem:[#allocation7 + $0xc0] sm:$0xff]
    %v219 = vld [vmem:[#allocation7 + $0xc8] sm:$0xff]
    %v220 = vld [vmem:[#allocation7 + $0xd0] sm:$0xff]
    %v221 = vld [vmem:[#allocation7 + $0xd8] sm:$0xff]
    %v222 = vld [vmem:[#allocation7 + $0xe0] sm:$0xff]
    %v223 = vld [vmem:[#allocation7 + $0xe8] sm:$0xff]
    %v224 = vld [vmem:[#allocation7 + $0xf0] sm:$0xff]
    %v225 = vld [vmem:[#allocation7 + $0xf8] sm:$0xff]
    %v226 = vld [vmem:[#allocation7 + $0x100] sm:$0xff]
    %v227 = vld [vmem:[#allocation7 + $0x108] sm:$0xff]
    %v228 = vld [vmem:[#allocation7 + $0x110] sm:$0xff]
    %v229 = vld [vmem:[#allocation7 + $0x118] sm:$0xff]
    %v230 = vld [vmem:[#allocation7 + $0x120] sm:$0xff]
    %v231 = vld [vmem:[#allocation7 + $0x128] sm:$0xff]
    %v232 = vld [vmem:[#allocation7 + $0x130] sm:$0xff]
    %v233 = vld [vmem:[#allocation7 + $0x138] sm:$0xff]
    %v234 = vld [vmem:[#allocation7 + $0x140] sm:$0xff]
    %v235 = vld [vmem:[#allocation7 + $0x148] sm:$0xff]
    %v236 = vld [vmem:[#allocation7 + $0x150] sm:$0xff]
    %v237 = vld [vmem:[#allocation7 + $0x158] sm:$0xff]
    %v238 = vld [vmem:[#allocation7 + $0x160] sm:$0xff]
    %v239 = vld [vmem:[#allocation7 + $0x168] sm:$0xff]
    %v240 = vld [vmem:[#allocation7 + $0x170] sm:$0xff]
    %v241 = vld [vmem:[#allocation7 + $0x178] sm:$0xff]
    %v242 = vld [vmem:[#allocation7 + $0x180] sm:$0xff]
    %v243 = vld [vmem:[#allocation7 + $0x188] sm:$0xff]
    %v244 = vld [vmem:[#allocation7 + $0x190] sm:$0xff]
    %v245 = vld [vmem:[#allocation7 + $0x198] sm:$0xff]
    %v246 = vld [vmem:[#allocation7 + $0x1a0] sm:$0xff]
    %v247 = vld [vmem:[#allocation7 + $0x1a8] sm:$0xff]
    %v248 = vld [vmem:[#allocation7 + $0x1b0] sm:$0xff]
    %v249 = vld [vmem:[#allocation7 + $0x1b8] sm:$0xff]
    %v250 = vld [vmem:[#allocation7 + $0x1c0] sm:$0xff]
    %v251 = vld [vmem:[#allocation7 + $0x1c8] sm:$0xff]
    %v252 = vld [vmem:[#allocation7 + $0x1d0] sm:$0xff]
    %v253 = vld [vmem:[#allocation7 + $0x1d8] sm:$0xff]
    %v254 = vld [vmem:[#allocation7 + $0x1e0] sm:$0xff]
    %v255 = vld [vmem:[#allocation7 + $0x1e8] sm:$0xff]
    %v256 = vld [vmem:[#allocation7 + $0x1f0] sm:$0xff]
    %v257 = vld [vmem:[#allocation7 + $0x1f8] sm:$0xff]
    %v258 = vld [vmem:[%s4] sm:$0x1]
    %v260 = vperm.slane %v258, 0
    %262 = vmatpush.msra.mxu0 %v209
    %263 = vmatpush.msra.mxu0 %v208
    %264 = vmatpush.msra.mxu0 %v207
    %265 = vmatpush.msra.mxu0 %v206
    %266 = vmatpush.msra.mxu0 %v205
    %267 = vmatpush.msra.mxu0 %v204
    %268 = vmatpush.msra.mxu0 %v203
    %269 = vmatpush.msra.mxu0 %v202
    %270 = vmatpush.msra.mxu0 %v201
    %271 = vmatpush.msra.mxu0 %v200
    %272 = vmatpush.msra.mxu0 %v199
    %273 = vmatpush.msra.mxu0 %v198
    %274 = vmatpush.msra.mxu0 %v197
    %275 = vmatpush.msra.mxu0 %v196
    %276 = vmatpush.msra.mxu0 %v195
    %277 = vmatpush.msra.mxu0 %v194
    %278 = vmatmul.f32.gmra.mxu0 %v190
    %v279 = vpop.f32.mrf.mxu0
    %v280 = vadd.f32 %v260, %v279
    %281 = vdwg.mxu0
    %282 = vmatpush.msra.mxu0 %v225
    %283 = vmatpush.msra.mxu0 %v224
    %284 = vmatpush.msra.mxu0 %v223
    %285 = vmatpush.msra.mxu0 %v222
    %286 = vmatpush.msra.mxu0 %v221
    %287 = vmatpush.msra.mxu0 %v220
    %288 = vmatpush.msra.mxu0 %v219
    %289 = vmatpush.msra.mxu0 %v218
    %290 = vmatpush.msra.mxu0 %v217
    %291 = vmatpush.msra.mxu0 %v216
    %292 = vmatpush.msra.mxu0 %v215
    %293 = vmatpush.msra.mxu0 %v214
    %294 = vmatpush.msra.mxu0 %v213
    %295 = vmatpush.msra.mxu0 %v212
    %296 = vmatpush.msra.mxu0 %v211
    %297 = vmatpush.msra.mxu0 %v210
    %298 = vmatmul.f32.gmra.mxu0 %v191
    %v299 = vpop.f32.mrf.mxu0
    %v300 = vadd.f32 %v280, %v299
    %301 = vdwg.mxu0
    %302 = vmatpush.msra.mxu0 %v241
    %303 = vmatpush.msra.mxu0 %v240
    %304 = vmatpush.msra.mxu0 %v239
    %305 = vmatpush.msra.mxu0 %v238
    %306 = vmatpush.msra.mxu0 %v237
    %307 = vmatpush.msra.mxu0 %v236
    %308 = vmatpush.msra.mxu0 %v235
    %309 = vmatpush.msra.mxu0 %v234
    %310 = vmatpush.msra.mxu0 %v233
    %311 = vmatpush.msra.mxu0 %v232
    %312 = vmatpush.msra.mxu0 %v231
    %313 = vmatpush.msra.mxu0 %v230
    %314 = vmatpush.msra.mxu0 %v229
    %315 = vmatpush.msra.mxu0 %v228
    %316 = vmatpush.msra.mxu0 %v227
    %317 = vmatpush.msra.mxu0 %v226
    %318 = vmatmul.f32.gmra.mxu0 %v192
    %v319 = vpop.f32.mrf.mxu0
    %v320 = vadd.f32 %v300, %v319
    %321 = vdwg.mxu0
    %322 = vmatpush.msra.mxu0 %v257
    %323 = vmatpush.msra.mxu0 %v256
    %324 = vmatpush.msra.mxu0 %v255
    %325 = vmatpush.msra.mxu0 %v254
    %326 = vmatpush.msra.mxu0 %v253
    %327 = vmatpush.msra.mxu0 %v252
    %328 = vmatpush.msra.mxu0 %v251
    %329 = vmatpush.msra.mxu0 %v250
    %330 = vmatpush.msra.mxu0 %v249
    %331 = vmatpush.msra.mxu0 %v248
    %332 = vmatpush.msra.mxu0 %v247
    %333 = vmatpush.msra.mxu0 %v246
    %334 = vmatpush.msra.mxu0 %v245
    %335 = vmatpush.msra.mxu0 %v244
    %336 = vmatpush.msra.mxu0 %v243
    %337 = vmatpush.msra.mxu0 %v242
    %338 = vmatmul.f32.gmra.mxu0 %v193
    %v339 = vpop.f32.mrf.mxu0
    %v340 = vadd.f32 %v320, %v339
    %341 = vdwg.mxu0
    %342 = vmax.xlane.f32.xlu0 %v340
    %v343 = vpop.xlane.xlu0 %342
    %v344 = vsub.f32 %v340, %v343
    %v345 = vmul.f32 %v344, 1.442695
    %v346 = vpow.pop %v345
    %347 = vadd.xlane.f32.xlu0 %v346
    %v348 = vpop.xlane.xlu0 %347
    %v349 = vrcp.pop %v348
    %v350 = vmul.f32 %v348, %v349
    %v351 = vsub.f32 1.0, %v350
    %v352 = vmul.f32 %v349, %v351
    %v353 = vadd.f32 %v349, %v352
    %vm354 = vweird.f32 %v348
    %vm355 = vweird.f32 %v349
    %vm356 = vmor %vm354, %vm355
    %v357 = vsel %vm356, %v349, %v353
    %v358 = vand.u32 2147483647, %v348
    %vm359 = vcmp.eq.f32.partialorder %v358, 8.507059e+37
    %v360 = vand.u32 %v348, 2147483648
    %v361 = vor.u32 1.1754944e-38, %v360
    %v362 = vsel %vm359, %v361, %v357
    %v363 = vmul.f32 %v346, %v362
    %vm364 = vcmask 31744
    %365 = vst.msk [vmem:[%s5] sm:$0xff] %vm364, %v363
    // Predicated region
    $region38: #{tpu_custom_call.1} parent=1 // pred_check
      _
    $region39: #{tpu_custom_call.1} parent=1 // pred_check_branch
      %367 = sbr.rel (0) target = $region41
    $region40: #{tpu_custom_call.1} parent=1 // pred_region
      _
    $region41: #{tpu_custom_call.1} parent=1 // pred_fallthru
      _
    // Predicated region
    $region42: #{tpu_custom_call.1} parent=1 // pred_check
      _
    $region43: #{tpu_custom_call.1} parent=1 // pred_check_branch
      %369 = sbr.rel (0) target = $region45
    $region44: #{tpu_custom_call.1} parent=1 // pred_region
      _
    $region45: #{tpu_custom_call.1} parent=1 // pred_fallthru
      _
    %370 = vsyncpa [#allocation3], 1
    %371 = vsyncpa [#allocation5], 1
    %372 = vsyncpa [#allocation8], 1

</llo_original>
